<compile_context>
chip_gen: v7x
topology: tpu7x:2x2x1
jax: 0.10.0
libtpu: 0.0.40
codegen_flags: <defaults>
</compile_context>

<pallas_src>
import functools

import jax
import jax.numpy as jnp
from jax.experimental import pallas as pl
from jax.experimental.pallas import tpu as pltpu

LANE = 128     # lane width (last dim)
SUBLANE = 8    # f32 sublane group (second-to-last dim)


def _round_up(n, m):
    return ((n + m - 1) // m) * m


def _decoder_fused_kernel(x_ref, *refs, depth: int, mxu_dtype):
    """Fused decoder kernel (whole stack, activations never leave VMEM/vregs).

    refs layout (all VMEM, feature dims zero-padded to 128):
      w0 [in, IN_pad]        b0 [1, IN_pad]       input_layer      (+Swish)
      w1 [IN_pad, H_pad]     b1 [1, H_pad]        hidden_network[0](+Swish)
      [wh [depth, H_pad, H_pad]  bh [depth, 1, H_pad]]  hidden_network[1:] (+Swish)
      wo [H_pad, OUT_pad]    bo [1, OUT_pad]      output_layer     (no act)
      o_ref [TB, OUT_pad]
    """
    if depth > 0:
        w0, b0, w1, b1, wh, bh, wo, bo, o_ref = refs
    else:
        w0, b0, w1, b1, wo, bo, o_ref = refs
        wh = bh = None

    def layer(h, w, b, *, swish):
        # MXU matmul in mxu_dtype (bf16 or f32), f32 accumulate, f32 bias.
        y = jnp.dot(h.astype(mxu_dtype), w,
                    preferred_element_type=jnp.float32) + b
        if swish:
            y = y * jax.nn.sigmoid(y)  # Swish in f32 (EUP slot, free-ish)
        return y

    h = x_ref[...].astype(jnp.float32)
    h = layer(h, w0[...], b0[...], swish=True)
    h = layer(h, w1[...], b1[...], swish=True)
    # Static unrolled loop over the stacked identical-shape hidden layers; the
    # scheduler can overlap the next layer's MXU push with this layer's Swish.
    for li in range(depth):
        h = layer(h, wh[li], bh[li], swish=True)
    h = layer(h, wo[...], bo[...], swish=False)
    o_ref[...] = h.astype(o_ref.dtype)


def prepare_params(params, *, use_bf16=False):
    """One-time padding/packing of decoder weights (NOT per forward call).

    params: list of (W [fan_in, fan_out] f32, b [fan_out] f32) for
            [input_layer, hidden_network[0], hidden_network[1:], output_layer].
    """
    num_layers = len(params)
    depth = num_layers - 3
    assert depth >= 0, "Decoder needs at least input/hidden[0]/output layers"

    in_features = params[0][0].shape[0]
    hidden_size = params[1][0].shape[1]
    out_features = params[-1][0].shape[1]

    in_pad = _round_up(in_features, LANE)
    h_pad = _round_up(hidden_size, LANE)
    out_pad = _round_up(out_features, LANE)
    w_dtype = jnp.bfloat16 if use_bf16 else jnp.float32

    def pad_w(w, r_pad, c_pad):
        r, c = w.shape
        wp = jnp.zeros((r_pad, c_pad), jnp.float32).at[:r, :c].set(w)
        return wp.astype(w_dtype)

    def pad_b(b, c_pad):
        return jnp.zeros((1, c_pad), jnp.float32).at[0, :b.shape[0]].set(b)

    w0, b0 = params[0]
    w1, b1 = params[1]
    wo, bo = params[-1]

    prep = dict(
        depth=depth,
        in_features=in_features,
        out_features=out_features,
        in_pad=in_pad, h_pad=h_pad, out_pad=out_pad,
        mxu_dtype=w_dtype,
        # input_layer: fan_in stays UNPADDED (matches unpadded x); fan_out -> 128.
        w0=pad_w(w0, in_features, in_pad), b0=pad_b(b0, in_pad),
        w1=pad_w(w1, in_pad, h_pad), b1=pad_b(b1, h_pad),
        wo=pad_w(wo, h_pad, out_pad), bo=pad_b(bo, out_pad),
        wh=None, bh=None,
    )
    if depth > 0:
        prep["wh"] = jnp.stack([pad_w(w, h_pad, h_pad) for (w, _) in params[2:-1]])
        prep["bh"] = jnp.stack([pad_b(b, h_pad) for (_, b) in params[2:-1]])
    return prep


def decoder_forward(x, prep, *, batch_tile=256):
    """Full Decoder forward in one pallas_call.

    x:    [B, input_size] f32 (unpadded)
    prep: output of prepare_params (padded once at init).
    """
    B, in_features = x.shape
    assert in_features == prep["in_features"]
    depth = prep["depth"]
    out_pad = prep["out_pad"]
    out_features = prep["out_features"]

    # ---- batch tiling: cdiv grid with a shrunk tile (minimal row padding).
    b8 = _round_up(B, SUBLANE)
    tile = max(SUBLANE, _round_up(min(batch_tile, b8), SUBLANE))
    n_steps = pl.cdiv(b8, tile)
    tb = _round_up(pl.cdiv(b8, n_steps), SUBLANE)
    b_pad = tb * n_steps

    if b_pad != B:
        x_in = jnp.zeros((b_pad, in_features), x.dtype).at[:B].set(x)
    else:
        x_in = x  # no host-side copy when the batch is already aligned

    def const_spec(shape):
        # Whole (already padded) array resident in VMEM; grid-invariant block.
        return pl.BlockSpec(shape, lambda i, _s=len(shape): (0,) * _s)

    inputs = [x_in, prep["w0"], prep["b0"], prep["w1"], prep["b1"]]
    in_specs = [
        pl.BlockSpec((tb, in_features), lambda i: (i, 0)),  # last dim == full dim
        const_spec(prep["w0"].shape), const_spec(prep["b0"].shape),
        const_spec(prep["w1"].shape), const_spec(prep["b1"].shape),
    ]
    if depth > 0:
        inputs += [prep["wh"], prep["bh"]]
        in_specs += [const_spec(prep["wh"].shape), const_spec(prep["bh"].shape)]
    inputs += [prep["wo"], prep["bo"]]
    in_specs += [const_spec(prep["wo"].shape), const_spec(prep["bo"].shape)]

    # ---- explicit VMEM budget: 2x (double-buffered) weights + per-step tiles.
    weight_bytes = sum(int(a.size) * a.dtype.itemsize for a in inputs[1:])
    tile_bytes = tb * in_features * 4 + tb * out_pad * 4
    vmem_budget = 2 * (weight_bytes + tile_bytes) + (4 << 20)
    vmem_limit = max(32 << 20, min(vmem_budget, 128 << 20))

    kernel = functools.partial(
        _decoder_fused_kernel, depth=depth, mxu_dtype=prep["mxu_dtype"])

    out_p = pl.pallas_call(
        kernel,
        out_shape=jax.ShapeDtypeStruct((b_pad, out_pad), x.dtype),
        grid=(n_steps,),
        in_specs=in_specs,
        out_specs=pl.BlockSpec((tb, out_pad), lambda i: (i, 0)),
        compiler_params=pltpu.CompilerParams(
            dimension_semantics=("parallel",),
            vmem_limit_bytes=int(vmem_limit),
        ),
    )(*inputs)
    return out_p[:B, :out_features]


def init_decoder_params(key, output_size, input_size, hidden_layer_depth, hidden_size):
    """Deterministic parameter init (PyTorch-Linear-style uniform bounds)."""
    dims = [(input_size, input_size), (input_size, hidden_size)]
    dims += [(hidden_size, hidden_size) for _ in range(hidden_layer_depth)]
    dims += [(hidden_size, output_size)]

    params = []
    for (fan_in, fan_out) in dims:
        key, kw, kb = jax.random.split(key, 3)
        bound = 1.0 / jnp.sqrt(jnp.float32(fan_in))
        w = jax.random.uniform(kw, (fan_in, fan_out), jnp.float32, -bound, bound)
        b = jax.random.uniform(kb, (fan_out,), jnp.float32, -bound, bound)
        params.append((w, b))
    return params


if __name__ == "__main__":
    # Small, module-consistent shapes.
    batch = 8
    input_size = 4          # latent dim
    hidden_size = 32
    hidden_layer_depth = 2
    output_size = 16

    key = jax.random.PRNGKey(0)
    key, kx = jax.random.split(key)
    x = jax.random.normal(kx, (batch, input_size), jnp.float32)

    params = init_decoder_params(
        key, output_size, input_size, hidden_layer_depth, hidden_size)

    # Pure-JAX reference of the same math.
    ref = x
    for i, (w, b) in enumerate(params):
        ref = ref @ w + b
        if i != len(params) - 1:
            ref = ref * jax.nn.sigmoid(ref)

    # f32 path (bit-for-bit comparable to the reference).
    prep_f32 = prepare_params(params, use_bf16=False)   # one-time padding
    out = jax.block_until_ready(decoder_forward(x, prep_f32))
    assert out.shape == (batch, output_size)
    assert jnp.allclose(out, ref, atol=1e-5, rtol=1e-5)

    # bf16 MXU path (native MXU dtype on v5e/v6e/v7x; looser tolerance).
    prep_bf16 = prepare_params(params, use_bf16=True)
    out_bf16 = jax.block_until_ready(decoder_forward(x, prep_bf16))
    assert out_bf16.shape == (batch, output_size)
    assert jnp.allclose(out_bf16, ref, atol=3e-2, rtol=3e-2)

    print("KERNEL_OK")
</pallas_src>

<mosaic_0001>
module attributes {stable_mosaic.version = 11 : i64} {
  func.func @_decoder_fused_kernel(%arg0: i32, %arg1: memref<8x4xf32, #tpu.memory_space<vmem>>, %arg2: memref<4x128xf32, #tpu.memory_space<vmem>>, %arg3: memref<1x128xf32, #tpu.memory_space<vmem>>, %arg4: memref<128x128xf32, #tpu.memory_space<vmem>>, %arg5: memref<1x128xf32, #tpu.memory_space<vmem>>, %arg6: memref<2x128x128xf32, #tpu.memory_space<vmem>>, %arg7: memref<2x1x128xf32, #tpu.memory_space<vmem>>, %arg8: memref<128x128xf32, #tpu.memory_space<vmem>>, %arg9: memref<1x128xf32, #tpu.memory_space<vmem>>, %arg10: memref<8x128xf32, #tpu.memory_space<vmem>>) attributes {dimension_semantics = [#tpu.dimension_semantics<parallel>], iteration_bounds = array<i64: 1>, scalar_prefetch = 0 : i64, scratch_operands = 0 : i64, tpu.core_type = #tpu.core_type<tc>, window_params = [{transform_indices = @transform_0, window_bounds = array<i64: 8, 4>}, {pipeline_mode = #tpu.pipeline_mode<synchronous>, transform_indices = @transform_1, window_bounds = array<i64: 4, 128>}, {pipeline_mode = #tpu.pipeline_mode<synchronous>, transform_indices = @transform_2, window_bounds = array<i64: 1, 128>}, {pipeline_mode = #tpu.pipeline_mode<synchronous>, transform_indices = @transform_3, window_bounds = array<i64: 128, 128>}, {pipeline_mode = #tpu.pipeline_mode<synchronous>, transform_indices = @transform_4, window_bounds = array<i64: 1, 128>}, {pipeline_mode = #tpu.pipeline_mode<synchronous>, transform_indices = @transform_5, window_bounds = array<i64: 2, 128, 128>}, {pipeline_mode = #tpu.pipeline_mode<synchronous>, transform_indices = @transform_6, window_bounds = array<i64: 2, 1, 128>}, {pipeline_mode = #tpu.pipeline_mode<synchronous>, transform_indices = @transform_7, window_bounds = array<i64: 128, 128>}, {pipeline_mode = #tpu.pipeline_mode<synchronous>, transform_indices = @transform_8, window_bounds = array<i64: 1, 128>}, {transform_indices = @transform_9, window_bounds = array<i64: 8, 128>}]} {
    %c0 = arith.constant 0 : index
    %c0_0 = arith.constant 0 : index
    %0 = vector.load %arg1[%c0, %c0_0] : memref<8x4xf32, #tpu.memory_space<vmem>>, vector<8x4xf32>
    %c0_1 = arith.constant 0 : index
    %c0_2 = arith.constant 0 : index
    %1 = vector.load %arg2[%c0_1, %c0_2] : memref<4x128xf32, #tpu.memory_space<vmem>>, vector<4x128xf32>
    %c0_3 = arith.constant 0 : index
    %c0_4 = arith.constant 0 : index
    %2 = vector.load %arg3[%c0_3, %c0_4] : memref<1x128xf32, #tpu.memory_space<vmem>>, vector<1x128xf32>
    %cst = arith.constant dense<0.000000e+00> : vector<8x128xf32>
    %3 = tpu.matmul %0, %1, %cst {dimension_numbers = #tpu.dot_dimension_numbers<[1], [0], [0], [1], [0, 0, 1, 1], [], []>} : vector<8x4xf32>, vector<4x128xf32>, vector<8x128xf32> -> vector<8x128xf32>
    %4 = vector.broadcast %2 : vector<1x128xf32> to vector<8x128xf32>
    %5 = arith.addf %3, %4 : vector<8x128xf32>
    %6 = arith.negf %5 : vector<8x128xf32>
    %7 = math.exp %6 : vector<8x128xf32>
    %cst_5 = arith.constant 1.000000e+00 : f32
    %8 = vector.broadcast %cst_5 : f32 to vector<8x128xf32>
    %9 = arith.addf %8, %7 : vector<8x128xf32>
    %10 = arith.divf %8, %9 : vector<8x128xf32>
    %11 = arith.mulf %5, %10 : vector<8x128xf32>
    %c0_6 = arith.constant 0 : index
    %c0_7 = arith.constant 0 : index
    %12 = vector.load %arg4[%c0_6, %c0_7] : memref<128x128xf32, #tpu.memory_space<vmem>>, vector<128x128xf32>
    %c0_8 = arith.constant 0 : index
    %c0_9 = arith.constant 0 : index
    %13 = vector.load %arg5[%c0_8, %c0_9] : memref<1x128xf32, #tpu.memory_space<vmem>>, vector<1x128xf32>
    %cst_10 = arith.constant dense<0.000000e+00> : vector<8x128xf32>
    %14 = tpu.matmul %11, %12, %cst_10 {dimension_numbers = #tpu.dot_dimension_numbers<[1], [0], [0], [1], [0, 0, 1, 1], [], []>} : vector<8x128xf32>, vector<128x128xf32>, vector<8x128xf32> -> vector<8x128xf32>
    %15 = vector.broadcast %13 : vector<1x128xf32> to vector<8x128xf32>
    %16 = arith.addf %14, %15 : vector<8x128xf32>
    %17 = arith.negf %16 : vector<8x128xf32>
    %18 = math.exp %17 : vector<8x128xf32>
    %cst_11 = arith.constant 1.000000e+00 : f32
    %19 = vector.broadcast %cst_11 : f32 to vector<8x128xf32>
    %20 = arith.addf %19, %18 : vector<8x128xf32>
    %21 = arith.divf %19, %20 : vector<8x128xf32>
    %22 = arith.mulf %16, %21 : vector<8x128xf32>
    %c0_12 = arith.constant 0 : index
    %c0_13 = arith.constant 0 : index
    %c0_14 = arith.constant 0 : index
    %23 = vector.load %arg6[%c0_12, %c0_13, %c0_14] : memref<2x128x128xf32, #tpu.memory_space<vmem>>, vector<1x128x128xf32>
    %24 = vector.shape_cast %23 : vector<1x128x128xf32> to vector<128x128xf32>
    %c0_15 = arith.constant 0 : index
    %c0_16 = arith.constant 0 : index
    %c0_17 = arith.constant 0 : index
    %25 = vector.load %arg7[%c0_15, %c0_16, %c0_17] : memref<2x1x128xf32, #tpu.memory_space<vmem>>, vector<1x1x128xf32>
    %26 = vector.shape_cast %25 : vector<1x1x128xf32> to vector<1x128xf32>
    %cst_18 = arith.constant dense<0.000000e+00> : vector<8x128xf32>
    %27 = tpu.matmul %22, %24, %cst_18 {dimension_numbers = #tpu.dot_dimension_numbers<[1], [0], [0], [1], [0, 0, 1, 1], [], []>} : vector<8x128xf32>, vector<128x128xf32>, vector<8x128xf32> -> vector<8x128xf32>
    %28 = vector.broadcast %26 : vector<1x128xf32> to vector<8x128xf32>
    %29 = arith.addf %27, %28 : vector<8x128xf32>
    %30 = arith.negf %29 : vector<8x128xf32>
    %31 = math.exp %30 : vector<8x128xf32>
    %cst_19 = arith.constant 1.000000e+00 : f32
    %32 = vector.broadcast %cst_19 : f32 to vector<8x128xf32>
    %33 = arith.addf %32, %31 : vector<8x128xf32>
    %34 = arith.divf %32, %33 : vector<8x128xf32>
    %35 = arith.mulf %29, %34 : vector<8x128xf32>
    %c1 = arith.constant 1 : index
    %c0_20 = arith.constant 0 : index
    %c0_21 = arith.constant 0 : index
    %36 = vector.load %arg6[%c1, %c0_20, %c0_21] : memref<2x128x128xf32, #tpu.memory_space<vmem>>, vector<1x128x128xf32>
    %37 = vector.shape_cast %36 : vector<1x128x128xf32> to vector<128x128xf32>
    %c1_22 = arith.constant 1 : index
    %c0_23 = arith.constant 0 : index
    %c0_24 = arith.constant 0 : index
    %38 = vector.load %arg7[%c1_22, %c0_23, %c0_24] : memref<2x1x128xf32, #tpu.memory_space<vmem>>, vector<1x1x128xf32>
    %39 = vector.shape_cast %38 : vector<1x1x128xf32> to vector<1x128xf32>
    %cst_25 = arith.constant dense<0.000000e+00> : vector<8x128xf32>
    %40 = tpu.matmul %35, %37, %cst_25 {dimension_numbers = #tpu.dot_dimension_numbers<[1], [0], [0], [1], [0, 0, 1, 1], [], []>} : vector<8x128xf32>, vector<128x128xf32>, vector<8x128xf32> -> vector<8x128xf32>
    %41 = vector.broadcast %39 : vector<1x128xf32> to vector<8x128xf32>
    %42 = arith.addf %40, %41 : vector<8x128xf32>
    %43 = arith.negf %42 : vector<8x128xf32>
    %44 = math.exp %43 : vector<8x128xf32>
    %cst_26 = arith.constant 1.000000e+00 : f32
    %45 = vector.broadcast %cst_26 : f32 to vector<8x128xf32>
    %46 = arith.addf %45, %44 : vector<8x128xf32>
    %47 = arith.divf %45, %46 : vector<8x128xf32>
    %48 = arith.mulf %42, %47 : vector<8x128xf32>
    %c0_27 = arith.constant 0 : index
    %c0_28 = arith.constant 0 : index
    %49 = vector.load %arg8[%c0_27, %c0_28] : memref<128x128xf32, #tpu.memory_space<vmem>>, vector<128x128xf32>
    %c0_29 = arith.constant 0 : index
    %c0_30 = arith.constant 0 : index
    %50 = vector.load %arg9[%c0_29, %c0_30] : memref<1x128xf32, #tpu.memory_space<vmem>>, vector<1x128xf32>
    %cst_31 = arith.constant dense<0.000000e+00> : vector<8x128xf32>
    %51 = tpu.matmul %48, %49, %cst_31 {dimension_numbers = #tpu.dot_dimension_numbers<[1], [0], [0], [1], [0, 0, 1, 1], [], []>} : vector<8x128xf32>, vector<128x128xf32>, vector<8x128xf32> -> vector<8x128xf32>
    %52 = vector.broadcast %50 : vector<1x128xf32> to vector<8x128xf32>
    %53 = arith.addf %51, %52 : vector<8x128xf32>
    %c0_32 = arith.constant 0 : index
    %c0_33 = arith.constant 0 : index
    %54 = vector.load %arg10[%c0_32, %c0_33] : memref<8x128xf32, #tpu.memory_space<vmem>>, vector<8x128xf32>
    tpu.vector_store %arg10[%c0_32, %c0_33], %53 {strides = array<i32>} : memref<8x128xf32, #tpu.memory_space<vmem>>, vector<8x128xf32>,
    return
  }
  func.func @transform_0(%arg0: i32) -> (i32, i32) {
    %c0_i32 = arith.constant 0 : i32
    %c0_i32_0 = arith.constant 0 : i32
    return %arg0, %c0_i32 : i32, i32
  }
  func.func @transform_1(%arg0: i32) -> (i32, i32) {
    %c0_i32 = arith.constant 0 : i32
    %c0_i32_0 = arith.constant 0 : i32
    %c0_i32_1 = arith.constant 0 : i32
    return %c0_i32, %c0_i32_0 : i32, i32
  }
  func.func @transform_2(%arg0: i32) -> (i32, i32) {
    %c0_i32 = arith.constant 0 : i32
    %c0_i32_0 = arith.constant 0 : i32
    %c0_i32_1 = arith.constant 0 : i32
    return %c0_i32, %c0_i32_0 : i32, i32
  }
  func.func @transform_3(%arg0: i32) -> (i32, i32) {
    %c0_i32 = arith.constant 0 : i32
    %c0_i32_0 = arith.constant 0 : i32
    %c0_i32_1 = arith.constant 0 : i32
    return %c0_i32, %c0_i32_0 : i32, i32
  }
  func.func @transform_4(%arg0: i32) -> (i32, i32) {
    %c0_i32 = arith.constant 0 : i32
    %c0_i32_0 = arith.constant 0 : i32
    %c0_i32_1 = arith.constant 0 : i32
    return %c0_i32, %c0_i32_0 : i32, i32
  }
  func.func @transform_5(%arg0: i32) -> (i32, i32, i32) {
    %c0_i32 = arith.constant 0 : i32
    %c0_i32_0 = arith.constant 0 : i32
    %c0_i32_1 = arith.constant 0 : i32
    %c0_i32_2 = arith.constant 0 : i32
    return %c0_i32, %c0_i32_0, %c0_i32_1 : i32, i32, i32
  }
  func.func @transform_6(%arg0: i32) -> (i32, i32, i32) {
    %c0_i32 = arith.constant 0 : i32
    %c0_i32_0 = arith.constant 0 : i32
    %c0_i32_1 = arith.constant 0 : i32
    %c0_i32_2 = arith.constant 0 : i32
    return %c0_i32, %c0_i32_0, %c0_i32_1 : i32, i32, i32
  }
  func.func @transform_7(%arg0: i32) -> (i32, i32) {
    %c0_i32 = arith.constant 0 : i32
    %c0_i32_0 = arith.constant 0 : i32
    %c0_i32_1 = arith.constant 0 : i32
    return %c0_i32, %c0_i32_0 : i32, i32
  }
  func.func @transform_8(%arg0: i32) -> (i32, i32) {
    %c0_i32 = arith.constant 0 : i32
    %c0_i32_0 = arith.constant 0 : i32
    %c0_i32_1 = arith.constant 0 : i32
    return %c0_i32, %c0_i32_0 : i32, i32
  }
  func.func @transform_9(%arg0: i32) -> (i32, i32) {
    %c0_i32 = arith.constant 0 : i32
    %c0_i32_0 = arith.constant 0 : i32
    return %arg0, %c0_i32 : i32, i32
  }
}

</mosaic_0001>

<llo_original>
// kernel: tpu_custom_call.1
$region0: #{tpu_custom_call.1}
  #allocation0 [shape = 'u32[]', space=smem, size = 0x4, offset = 0x4, fixed_abs, tag = 'smem constant byte address 0x4 - core index']
  #allocation1 [shape = 'u32[144,128]{1,0:T(1,128)}', space=vmem, size = 0x12000, scoped, tag = 'internal scratch']
  %s0 = inlined_call_operand.vmem [shape: f32[8,4], index: 0, kind: input, shape index: {}]
  %s1 = inlined_call_operand.vmem [shape: f32[4,128], index: 1, kind: input, shape index: {}]
  %s2 = inlined_call_operand.vmem [shape: f32[1,128], index: 2, kind: input, shape index: {}]
  %s3 = inlined_call_operand.hbm [shape: f32[128,128], index: 3, kind: input, shape index: {}]
  %s4 = inlined_call_operand.vmem [shape: f32[1,128], index: 4, kind: input, shape index: {}]
  %s5 = inlined_call_operand.hbm [shape: f32[2,128,128], index: 5, kind: input, shape index: {}]
  %s6 = inlined_call_operand.vmem [shape: f32[2,1,128], index: 6, kind: input, shape index: {}]
  %s7 = inlined_call_operand.hbm [shape: f32[128,128], index: 7, kind: input, shape index: {}]
  %s8 = inlined_call_operand.vmem [shape: f32[1,128], index: 8, kind: input, shape index: {}]
  %s9 = inlined_call_operand.hbm [shape: f32[8,128], index: 9, kind: output, shape index: {}]
  %s10 = sld [smem:[#allocation0]]
  $region58: #{tpu_custom_call.1} parent=0
    _
  %s12 = ssub.s32 1, %s10
  %s13 = scalar_select 0, %s12, %s10
  $region1: #{tpu_custom_call.1} parent=0
    #allocation2 [shape = 'u8[65536]{0}', space=vmem, size = 0x10000, scoped, tag = 'input window, operand 3, single buffered']
    #allocation3 [shape = 's32[1]{0}', space=sflag, size = 0x4, scoped, tag = 'scoped memory for tpu_custom_call.1']
    #allocation4 [shape = 's32[1]{0}', space=sflag, size = 0x4, scoped, tag = 'scoped memory for tpu_custom_call.1']
    #allocation5 [shape = 'u8[131072]{0}', space=vmem, size = 0x20000, scoped, tag = 'input window, operand 5, single buffered']
    #allocation6 [shape = 's32[1]{0}', space=sflag, size = 0x4, scoped, tag = 'scoped memory for tpu_custom_call.1']
    #allocation7 [shape = 'u8[65536]{0}', space=vmem, size = 0x10000, scoped, tag = 'input window, operand 7, single buffered']
    #allocation8 [shape = 'u8[4096]{0}', space=vmem, size = 0x1000, scoped, tag = 'output window, operand 0, single buffered']
    %14 = vsyncpa [#allocation3], 0
    %15 = vsyncpa [#allocation6], 0
    %16 = vsyncpa [#allocation4], 0
    // Predicated region
    $region2: #{tpu_custom_call.1} parent=1 // pred_check
      _
    $region3: #{tpu_custom_call.1} parent=1 // pred_check_branch
      %18 = sbr.rel (0) target = $region5
    $region4: #{tpu_custom_call.1} parent=1 // pred_region
      _
    $region5: #{tpu_custom_call.1} parent=1 // pred_fallthru
      _
    // Predicated region
    $region6: #{tpu_custom_call.1} parent=1 // pred_check
      _
    $region7: #{tpu_custom_call.1} parent=1 // pred_check_branch
      %20 = sbr.rel (0) target = $region9
    $region8: #{tpu_custom_call.1} parent=1 // pred_region
      _
    $region9: #{tpu_custom_call.1} parent=1 // pred_fallthru
      _
    // Predicated region
    $region10: #{tpu_custom_call.1} parent=1 // pred_check
      _
    $region11: #{tpu_custom_call.1} parent=1 // pred_check_branch
      %22 = sbr.rel (0) target = $region13
    $region12: #{tpu_custom_call.1} parent=1 // pred_region
      _
    $region13: #{tpu_custom_call.1} parent=1 // pred_fallthru
      _
    // Predicated region
    $region14: #{tpu_custom_call.1} parent=1 // pred_check
      _
    $region15: #{tpu_custom_call.1} parent=1 // pred_check_branch
      %24 = sbr.rel (0) target = $region17
    $region16: #{tpu_custom_call.1} parent=1 // pred_region
      %s26 = ssub.s32 2048, 2048
      %27 = vsyncadd [#allocation3], %s26
      %s28 = sshll.u32 [#allocation2], 4
      %s29 = int_to_ptr.vmem [resolvable:$true] %s28
      %34 = dma.hbm_to_vmem [thread:$0]  %s3, 2048, %s29, [#allocation3], 128, 128, 8
    $region17: #{tpu_custom_call.1} parent=1 // pred_fallthru
      _
    // Predicated region
    $region18: #{tpu_custom_call.1} parent=1 // pred_check
      _
    $region19: #{tpu_custom_call.1} parent=1 // pred_check_branch
      %36 = sbr.rel (0) target = $region21
    $region20: #{tpu_custom_call.1} parent=1 // pred_region
      _
    $region21: #{tpu_custom_call.1} parent=1 // pred_fallthru
      _
    // Predicated region
    $region22: #{tpu_custom_call.1} parent=1 // pred_check
      _
    $region23: #{tpu_custom_call.1} parent=1 // pred_check_branch
      %38 = sbr.rel (0) target = $region25
    $region24: #{tpu_custom_call.1} parent=1 // pred_region
      %s40 = ssub.s32 4096, 4096
      %41 = vsyncadd [#allocation6], %s40
      %s42 = sshll.u32 [#allocation5], 4
      %s43 = int_to_ptr.vmem [resolvable:$true] %s42
      %48 = dma.hbm_to_vmem [thread:$0]  %s5, 4096, %s43, [#allocation6], 128, 128, 8
    $region25: #{tpu_custom_call.1} parent=1 // pred_fallthru
      _
    // Predicated region
    $region26: #{tpu_custom_call.1} parent=1 // pred_check
      _
    $region27: #{tpu_custom_call.1} parent=1 // pred_check_branch
      %50 = sbr.rel (0) target = $region29
    $region28: #{tpu_custom_call.1} parent=1 // pred_region
      _
    $region29: #{tpu_custom_call.1} parent=1 // pred_fallthru
      _
    // Predicated region
    $region30: #{tpu_custom_call.1} parent=1 // pred_check
      _
    $region31: #{tpu_custom_call.1} parent=1 // pred_check_branch
      %52 = sbr.rel (0) target = $region33
    $region32: #{tpu_custom_call.1} parent=1 // pred_region
      %s54 = ssub.s32 2048, 2048
      %55 = vsyncadd [#allocation6], %s54
      %s56 = sshll.u32 [#allocation7], 4
      %s57 = int_to_ptr.vmem [resolvable:$true] %s56
      %62 = dma.hbm_to_vmem [thread:$0]  %s7, 2048, %s57, [#allocation6], 128, 128, 8
    $region33: #{tpu_custom_call.1} parent=1 // pred_fallthru
      _
    // Predicated region
    $region34: #{tpu_custom_call.1} parent=1 // pred_check
      _
    $region35: #{tpu_custom_call.1} parent=1 // pred_check_branch
      %64 = sbr.rel (0) target = $region37
    $region36: #{tpu_custom_call.1} parent=1 // pred_region
      _
    $region37: #{tpu_custom_call.1} parent=1 // pred_fallthru
      _
    // Predicated region
    $region38: #{tpu_custom_call.1} parent=1 // pred_check
      _
    $region39: #{tpu_custom_call.1} parent=1 // pred_check_branch
      %66 = sbr.rel (0) target = $region41
    $region40: #{tpu_custom_call.1} parent=1 // pred_region
      %67 = dma.done [#allocation3], 2048
    $region41: #{tpu_custom_call.1} parent=1 // pred_fallthru
      _
    // Predicated region
    $region42: #{tpu_custom_call.1} parent=1 // pred_check
      _
    $region43: #{tpu_custom_call.1} parent=1 // pred_check_branch
      %69 = sbr.rel (0) target = $region45
    $region44: #{tpu_custom_call.1} parent=1 // pred_region
      %70 = dma.done [#allocation6], 4096
    $region45: #{tpu_custom_call.1} parent=1 // pred_fallthru
      _
    // Predicated region
    $region46: #{tpu_custom_call.1} parent=1 // pred_check
      _
    $region47: #{tpu_custom_call.1} parent=1 // pred_check_branch
      %72 = sbr.rel (0) target = $region49
    $region48: #{tpu_custom_call.1} parent=1 // pred_region
      %73 = dma.done [#allocation6], 2048
    $region49: #{tpu_custom_call.1} parent=1 // pred_fallthru
      _
    %v74 = vld [vmem:[%s0] sm:$0xff]
    %v75 = vld [vmem:[%s1] sm:$0xf]
    %v76 = vld [vmem:[%s2] sm:$0x1]
    %v78 = vlaneseq
    %v79 = vshrl.u32 %v78, 7
    %v80 = vsub.s32 0, %v79
    %v81 = vrot.slane %v76, %v80
    %vm83 = vcmask 31744
    %v85 = vsel %vm83, %v74, 0
    %vm87 = vcmask 1043456
    %v89 = vsel %vm87, %v75, 0
    %91 = vmatprep.subr.mxu0 0.0
    %92 = vmatpush1.msra.mxu0 %v89
    %93 = vmatprep.subr.mxu0 0.0
    %94 = vmatpush1.msra.mxu0 0.0
    %95 = vmatprep.subr.mxu0 0.0
    %96 = vmatpush1.msra.mxu0 0.0
    %97 = vmatprep.subr.mxu0 0.0
    %98 = vmatpush1.msra.mxu0 0.0
    %99 = vmatprep.subr.mxu0 0.0
    %100 = vmatpush1.msra.mxu0 0.0
    %101 = vmatprep.subr.mxu0 0.0
    %102 = vmatpush1.msra.mxu0 0.0
    %103 = vmatprep.subr.mxu0 0.0
    %104 = vmatpush1.msra.mxu0 0.0
    %105 = vmatprep.subr.mxu0 0.0
    %106 = vmatpush1.msra.mxu0 0.0
    %107 = vmatprep.subr.mxu0 0.0
    %108 = vmatpush1.msra.mxu0 0.0
    %109 = vmatprep.subr.mxu0 0.0
    %110 = vmatpush1.msra.mxu0 0.0
    %111 = vmatprep.subr.mxu0 0.0
    %112 = vmatpush1.msra.mxu0 0.0
    %113 = vmatprep.subr.mxu0 0.0
    %114 = vmatpush1.msra.mxu0 0.0
    %115 = vmatprep.subr.mxu0 0.0
    %116 = vmatpush1.msra.mxu0 0.0
    %117 = vmatprep.subr.mxu0 0.0
    %118 = vmatpush1.msra.mxu0 0.0
    %119 = vmatprep.subr.mxu0 0.0
    %120 = vmatpush1.msra.mxu0 0.0
    %121 = vmatprep.subr.mxu0 0.0
    %122 = vmatpush1.msra.mxu0 0.0
    %123 = vmatprep.subr.mxu0 0.0
    %124 = vmatpush1.msra.mxu0 0.0
    %125 = vmatprep.subr.mxu0 0.0
    %126 = vmatpush1.msra.mxu0 0.0
    %127 = vmatprep.subr.mxu0 0.0
    %128 = vmatpush1.msra.mxu0 0.0
    %129 = vmatprep.subr.mxu0 0.0
    %130 = vmatpush1.msra.mxu0 0.0
    %131 = vmatprep.subr.mxu0 0.0
    %132 = vmatpush1.msra.mxu0 0.0
    %133 = vmatprep.subr.mxu0 0.0
    %134 = vmatpush1.msra.mxu0 0.0
    %135 = vmatprep.subr.mxu0 0.0
    %136 = vmatpush1.msra.mxu0 0.0
    %137 = vmatprep.subr.mxu0 0.0
    %138 = vmatpush1.msra.mxu0 0.0
    %139 = vmatprep.subr.mxu0 0.0
    %140 = vmatpush1.msra.mxu0 0.0
    %141 = vmatprep.subr.mxu0 0.0
    %142 = vmatpush1.msra.mxu0 0.0
    %143 = vmatprep.subr.mxu0 0.0
    %144 = vmatpush1.msra.mxu0 0.0
    %145 = vmatprep.subr.mxu0 0.0
    %146 = vmatpush1.msra.mxu0 0.0
    %147 = vmatprep.subr.mxu0 0.0
    %148 = vmatpush1.msra.mxu0 0.0
    %149 = vmatprep.subr.mxu0 0.0
    %150 = vmatpush1.msra.mxu0 0.0
    %151 = vmatprep.subr.mxu0 0.0
    %152 = vmatpush1.msra.mxu0 0.0
    %153 = vmatprep.subr.mxu0 0.0
    %154 = vmatpush1.msra.mxu0 0.0
    %155 = vmatprep.mubr.f32.mxu0 0.0
    %156 = vmatmul.mubr.f32.gmra.mrb[0].mxu0 %v85
    %v157 = vpop.f32.mrb[0].mxu0
    %v158 = vadd.f32 %v81, %v157
    %v159 = vpop.f32.mrb[0].mxu0
    %160 = vdwg.mxu0
    %v161 = vxor.u32 %v158, 2147483648
    %v162 = vmul.f32 %v161, 1.442695
    %v163 = vpow.pop %v162
    %v164 = vadd.f32 %v163, 1.0
    %v165 = vrcp.pop %v164
    %v166 = vmul.f32 1.0, %v165
    %v167 = vmul.f32 %v158, %v166
    %v168 = vld [vmem:[#allocation2] sm:$0xff]
    %v169 = vld [vmem:[#allocation2 + $0x8] sm:$0xff]
    %v170 = vld [vmem:[#allocation2 + $0x10] sm:$0xff]
    %v171 = vld [vmem:[#allocation2 + $0x18] sm:$0xff]
    %v172 = vld [vmem:[#allocation2 + $0x20] sm:$0xff]
    %v173 = vld [vmem:[#allocation2 + $0x28] sm:$0xff]
    %v174 = vld [vmem:[#allocation2 + $0x30] sm:$0xff]
    %v175 = vld [vmem:[#allocation2 + $0x38] sm:$0xff]
    %v176 = vld [vmem:[#allocation2 + $0x40] sm:$0xff]
    %v177 = vld [vmem:[#allocation2 + $0x48] sm:$0xff]
    %v178 = vld [vmem:[#allocation2 + $0x50] sm:$0xff]
    %v179 = vld [vmem:[#allocation2 + $0x58] sm:$0xff]
    %v180 = vld [vmem:[#allocation2 + $0x60] sm:$0xff]
    %v181 = vld [vmem:[#allocation2 + $0x68] sm:$0xff]
    %v182 = vld [vmem:[#allocation2 + $0x70] sm:$0xff]
    %v183 = vld [vmem:[#allocation2 + $0x78] sm:$0xff]
    %v184 = vld [vmem:[%s4] sm:$0x1]
    %v186 = vlaneseq
    %v187 = vshrl.u32 %v186, 7
    %v188 = vsub.s32 0, %v187
    %v189 = vrot.slane %v184, %v188
    %191 = vmatprep.subr.mxu0 0.0
    %192 = vmatpush1.msra.mxu0 %v168
    %193 = vmatprep.subr.mxu0 0.0
    %194 = vmatpush1.msra.mxu0 %v169
    %195 = vmatprep.subr.mxu0 0.0
    %196 = vmatpush1.msra.mxu0 %v170
    %197 = vmatprep.subr.mxu0 0.0
    %198 = vmatpush1.msra.mxu0 %v171
    %199 = vmatprep.subr.mxu0 0.0
    %200 = vmatpush1.msra.mxu0 %v172
    %201 = vmatprep.subr.mxu0 0.0
    %202 = vmatpush1.msra.mxu0 %v173
    %203 = vmatprep.subr.mxu0 0.0
    %204 = vmatpush1.msra.mxu0 %v174
    %205 = vmatprep.subr.mxu0 0.0
    %206 = vmatpush1.msra.mxu0 %v175
    %207 = vmatprep.subr.mxu0 0.0
    %208 = vmatpush1.msra.mxu0 %v176
    %209 = vmatprep.subr.mxu0 0.0
    %210 = vmatpush1.msra.mxu0 %v177
    %211 = vmatprep.subr.mxu0 0.0
    %212 = vmatpush1.msra.mxu0 %v178
    %213 = vmatprep.subr.mxu0 0.0
    %214 = vmatpush1.msra.mxu0 %v179
    %215 = vmatprep.subr.mxu0 0.0
    %216 = vmatpush1.msra.mxu0 %v180
    %217 = vmatprep.subr.mxu0 0.0
    %218 = vmatpush1.msra.mxu0 %v181
    %219 = vmatprep.subr.mxu0 0.0
    %220 = vmatpush1.msra.mxu0 %v182
    %221 = vmatprep.subr.mxu0 0.0
    %222 = vmatpush1.msra.mxu0 %v183
    %223 = vmatprep.subr.mxu0 0.0
    %224 = vmatpush1.msra.mxu0 0.0
    %225 = vmatprep.subr.mxu0 0.0
    %226 = vmatpush1.msra.mxu0 0.0
    %227 = vmatprep.subr.mxu0 0.0
    %228 = vmatpush1.msra.mxu0 0.0
    %229 = vmatprep.subr.mxu0 0.0
    %230 = vmatpush1.msra.mxu0 0.0
    %231 = vmatprep.subr.mxu0 0.0
    %232 = vmatpush1.msra.mxu0 0.0
    %233 = vmatprep.subr.mxu0 0.0
    %234 = vmatpush1.msra.mxu0 0.0
    %235 = vmatprep.subr.mxu0 0.0
    %236 = vmatpush1.msra.mxu0 0.0
    %237 = vmatprep.subr.mxu0 0.0
    %238 = vmatpush1.msra.mxu0 0.0
    %239 = vmatprep.subr.mxu0 0.0
    %240 = vmatpush1.msra.mxu0 0.0
    %241 = vmatprep.subr.mxu0 0.0
    %242 = vmatpush1.msra.mxu0 0.0
    %243 = vmatprep.subr.mxu0 0.0
    %244 = vmatpush1.msra.mxu0 0.0
    %245 = vmatprep.subr.mxu0 0.0
    %246 = vmatpush1.msra.mxu0 0.0
    %247 = vmatprep.subr.mxu0 0.0
    %248 = vmatpush1.msra.mxu0 0.0
    %249 = vmatprep.subr.mxu0 0.0
    %250 = vmatpush1.msra.mxu0 0.0
    %251 = vmatprep.subr.mxu0 0.0
    %252 = vmatpush1.msra.mxu0 0.0
    %253 = vmatprep.subr.mxu0 0.0
    %254 = vmatpush1.msra.mxu0 0.0
    %255 = vmatprep.mubr.f32.mxu0 0.0
    %256 = vmatmul.mubr.f32.gmra.mrb[0].mxu0 %v167
    %v257 = vpop.f32.mrb[0].mxu0
    %v258 = vadd.f32 %v189, %v257
    %v259 = vpop.f32.mrb[0].mxu0
    %260 = vdwg.mxu0
    %v261 = vxor.u32 %v258, 2147483648
    %v262 = vmul.f32 %v261, 1.442695
    %v263 = vpow.pop %v262
    %v264 = vadd.f32 %v263, 1.0
    %v265 = vrcp.pop %v264
    %v266 = vmul.f32 1.0, %v265
    %v267 = vmul.f32 %v258, %v266
    %v268 = vld [vmem:[#allocation5] sm:$0xff]
    %v269 = vld [vmem:[#allocation5 + $0x8] sm:$0xff]
    %v270 = vld [vmem:[#allocation5 + $0x10] sm:$0xff]
    %v271 = vld [vmem:[#allocation5 + $0x18] sm:$0xff]
    %v272 = vld [vmem:[#allocation5 + $0x20] sm:$0xff]
    %v273 = vld [vmem:[#allocation5 + $0x28] sm:$0xff]
    %v274 = vld [vmem:[#allocation5 + $0x30] sm:$0xff]
    %v275 = vld [vmem:[#allocation5 + $0x38] sm:$0xff]
    %v276 = vld [vmem:[#allocation5 + $0x40] sm:$0xff]
    %v277 = vld [vmem:[#allocation5 + $0x48] sm:$0xff]
    %v278 = vld [vmem:[#allocation5 + $0x50] sm:$0xff]
    %v279 = vld [vmem:[#allocation5 + $0x58] sm:$0xff]
    %v280 = vld [vmem:[#allocation5 + $0x60] sm:$0xff]
    %v281 = vld [vmem:[#allocation5 + $0x68] sm:$0xff]
    %v282 = vld [vmem:[#allocation5 + $0x70] sm:$0xff]
    %v283 = vld [vmem:[#allocation5 + $0x78] sm:$0xff]
    %v284 = vld [vmem:[%s6] sm:$0x1]
    %v286 = vlaneseq
    %v287 = vshrl.u32 %v286, 7
    %v288 = vsub.s32 0, %v287
    %v289 = vrot.slane %v284, %v288
    %291 = vmatprep.subr.mxu0 0.0
    %292 = vmatpush1.msra.mxu0 %v268
    %293 = vmatprep.subr.mxu0 0.0
    %294 = vmatpush1.msra.mxu0 %v269
    %295 = vmatprep.subr.mxu0 0.0
    %296 = vmatpush1.msra.mxu0 %v270
    %297 = vmatprep.subr.mxu0 0.0
    %298 = vmatpush1.msra.mxu0 %v271
    %299 = vmatprep.subr.mxu0 0.0
    %300 = vmatpush1.msra.mxu0 %v272
    %301 = vmatprep.subr.mxu0 0.0
    %302 = vmatpush1.msra.mxu0 %v273
    %303 = vmatprep.subr.mxu0 0.0
    %304 = vmatpush1.msra.mxu0 %v274
    %305 = vmatprep.subr.mxu0 0.0
    %306 = vmatpush1.msra.mxu0 %v275
    %307 = vmatprep.subr.mxu0 0.0
    %308 = vmatpush1.msra.mxu0 %v276
    %309 = vmatprep.subr.mxu0 0.0
    %310 = vmatpush1.msra.mxu0 %v277
    %311 = vmatprep.subr.mxu0 0.0
    %312 = vmatpush1.msra.mxu0 %v278
    %313 = vmatprep.subr.mxu0 0.0
    %314 = vmatpush1.msra.mxu0 %v279
    %315 = vmatprep.subr.mxu0 0.0
    %316 = vmatpush1.msra.mxu0 %v280
    %317 = vmatprep.subr.mxu0 0.0
    %318 = vmatpush1.msra.mxu0 %v281
    %319 = vmatprep.subr.mxu0 0.0
    %320 = vmatpush1.msra.mxu0 %v282
    %321 = vmatprep.subr.mxu0 0.0
    %322 = vmatpush1.msra.mxu0 %v283
    %323 = vmatprep.subr.mxu0 0.0
    %324 = vmatpush1.msra.mxu0 0.0
    %325 = vmatprep.subr.mxu0 0.0
    %326 = vmatpush1.msra.mxu0 0.0
    %327 = vmatprep.subr.mxu0 0.0
    %328 = vmatpush1.msra.mxu0 0.0
    %329 = vmatprep.subr.mxu0 0.0
    %330 = vmatpush1.msra.mxu0 0.0
    %331 = vmatprep.subr.mxu0 0.0
    %332 = vmatpush1.msra.mxu0 0.0
    %333 = vmatprep.subr.mxu0 0.0
    %334 = vmatpush1.msra.mxu0 0.0
    %335 = vmatprep.subr.mxu0 0.0
    %336 = vmatpush1.msra.mxu0 0.0
    %337 = vmatprep.subr.mxu0 0.0
    %338 = vmatpush1.msra.mxu0 0.0
    %339 = vmatprep.subr.mxu0 0.0
    %340 = vmatpush1.msra.mxu0 0.0
    %341 = vmatprep.subr.mxu0 0.0
    %342 = vmatpush1.msra.mxu0 0.0
    %343 = vmatprep.subr.mxu0 0.0
    %344 = vmatpush1.msra.mxu0 0.0
    %345 = vmatprep.subr.mxu0 0.0
    %346 = vmatpush1.msra.mxu0 0.0
    %347 = vmatprep.subr.mxu0 0.0
    %348 = vmatpush1.msra.mxu0 0.0
    %349 = vmatprep.subr.mxu0 0.0
    %350 = vmatpush1.msra.mxu0 0.0
    %351 = vmatprep.subr.mxu0 0.0
    %352 = vmatpush1.msra.mxu0 0.0
    %353 = vmatprep.subr.mxu0 0.0
    %354 = vmatpush1.msra.mxu0 0.0
    %355 = vmatprep.mubr.f32.mxu0 0.0
    %356 = vmatmul.mubr.f32.gmra.mrb[0].mxu0 %v267
    %v357 = vpop.f32.mrb[0].mxu0
    %v358 = vadd.f32 %v289, %v357
    %v359 = vpop.f32.mrb[0].mxu0
    %360 = vdwg.mxu0
    %v361 = vxor.u32 %v358, 2147483648
    %v362 = vmul.f32 %v361, 1.442695
    %v363 = vpow.pop %v362
    %v364 = vadd.f32 %v363, 1.0
    %v365 = vrcp.pop %v364
    %v366 = vmul.f32 1.0, %v365
    %v367 = vmul.f32 %v358, %v366
    %s368 = scalar_lea.vmem [#allocation5], 128
    %v369 = vld [vmem:[%s368] sm:$0xff]
    %v370 = vld [vmem:[%s368 + $0x8] sm:$0xff]
    %v371 = vld [vmem:[%s368 + $0x10] sm:$0xff]
    %v372 = vld [vmem:[%s368 + $0x18] sm:$0xff]
    %v373 = vld [vmem:[%s368 + $0x20] sm:$0xff]
    %v374 = vld [vmem:[%s368 + $0x28] sm:$0xff]
    %v375 = vld [vmem:[%s368 + $0x30] sm:$0xff]
    %v376 = vld [vmem:[%s368 + $0x38] sm:$0xff]
    %v377 = vld [vmem:[%s368 + $0x40] sm:$0xff]
    %v378 = vld [vmem:[%s368 + $0x48] sm:$0xff]
    %v379 = vld [vmem:[%s368 + $0x50] sm:$0xff]
    %v380 = vld [vmem:[%s368 + $0x58] sm:$0xff]
    %v381 = vld [vmem:[%s368 + $0x60] sm:$0xff]
    %v382 = vld [vmem:[%s368 + $0x68] sm:$0xff]
    %v383 = vld [vmem:[%s368 + $0x70] sm:$0xff]
    %v384 = vld [vmem:[%s368 + $0x78] sm:$0xff]
    %s385 = scalar_lea.vmem %s6, 1
    %v386 = vld [vmem:[%s385] sm:$0x1]
    %v388 = vlaneseq
    %v389 = vshrl.u32 %v388, 7
    %v390 = vsub.s32 0, %v389
    %v391 = vrot.slane %v386, %v390
    %393 = vmatprep.subr.mxu0 0.0
    %394 = vmatpush1.msra.mxu0 %v369
    %395 = vmatprep.subr.mxu0 0.0
    %396 = vmatpush1.msra.mxu0 %v370
    %397 = vmatprep.subr.mxu0 0.0
    %398 = vmatpush1.msra.mxu0 %v371
    %399 = vmatprep.subr.mxu0 0.0
    %400 = vmatpush1.msra.mxu0 %v372
    %401 = vmatprep.subr.mxu0 0.0
    %402 = vmatpush1.msra.mxu0 %v373
    %403 = vmatprep.subr.mxu0 0.0
    %404 = vmatpush1.msra.mxu0 %v374
    %405 = vmatprep.subr.mxu0 0.0
    %406 = vmatpush1.msra.mxu0 %v375
    %407 = vmatprep.subr.mxu0 0.0
    %408 = vmatpush1.msra.mxu0 %v376
    %409 = vmatprep.subr.mxu0 0.0
    %410 = vmatpush1.msra.mxu0 %v377
    %411 = vmatprep.subr.mxu0 0.0
    %412 = vmatpush1.msra.mxu0 %v378
    %413 = vmatprep.subr.mxu0 0.0
    %414 = vmatpush1.msra.mxu0 %v379
    %415 = vmatprep.subr.mxu0 0.0
    %416 = vmatpush1.msra.mxu0 %v380
    %417 = vmatprep.subr.mxu0 0.0
    %418 = vmatpush1.msra.mxu0 %v381
    %419 = vmatprep.subr.mxu0 0.0
    %420 = vmatpush1.msra.mxu0 %v382
    %421 = vmatprep.subr.mxu0 0.0
    %422 = vmatpush1.msra.mxu0 %v383
    %423 = vmatprep.subr.mxu0 0.0
    %424 = vmatpush1.msra.mxu0 %v384
    %425 = vmatprep.subr.mxu0 0.0
    %426 = vmatpush1.msra.mxu0 0.0
    %427 = vmatprep.subr.mxu0 0.0
    %428 = vmatpush1.msra.mxu0 0.0
    %429 = vmatprep.subr.mxu0 0.0
    %430 = vmatpush1.msra.mxu0 0.0
    %431 = vmatprep.subr.mxu0 0.0
    %432 = vmatpush1.msra.mxu0 0.0
    %433 = vmatprep.subr.mxu0 0.0
    %434 = vmatpush1.msra.mxu0 0.0
    %435 = vmatprep.subr.mxu0 0.0
    %436 = vmatpush1.msra.mxu0 0.0
    %437 = vmatprep.subr.mxu0 0.0
    %438 = vmatpush1.msra.mxu0 0.0
    %439 = vmatprep.subr.mxu0 0.0
    %440 = vmatpush1.msra.mxu0 0.0
    %441 = vmatprep.subr.mxu0 0.0
    %442 = vmatpush1.msra.mxu0 0.0
    %443 = vmatprep.subr.mxu0 0.0
    %444 = vmatpush1.msra.mxu0 0.0
    %445 = vmatprep.subr.mxu0 0.0
    %446 = vmatpush1.msra.mxu0 0.0
    %447 = vmatprep.subr.mxu0 0.0
    %448 = vmatpush1.msra.mxu0 0.0
    %449 = vmatprep.subr.mxu0 0.0
    %450 = vmatpush1.msra.mxu0 0.0
    %451 = vmatprep.subr.mxu0 0.0
    %452 = vmatpush1.msra.mxu0 0.0
    %453 = vmatprep.subr.mxu0 0.0
    %454 = vmatpush1.msra.mxu0 0.0
    %455 = vmatprep.subr.mxu0 0.0
    %456 = vmatpush1.msra.mxu0 0.0
    %457 = vmatprep.mubr.f32.mxu0 0.0
    %458 = vmatmul.mubr.f32.gmra.mrb[0].mxu0 %v367
    %v459 = vpop.f32.mrb[0].mxu0
    %v460 = vadd.f32 %v391, %v459
    %v461 = vpop.f32.mrb[0].mxu0
    %462 = vdwg.mxu0
    %v463 = vxor.u32 %v460, 2147483648
    %v464 = vmul.f32 %v463, 1.442695
    %v465 = vpow.pop %v464
    %v466 = vadd.f32 %v465, 1.0
    %v467 = vrcp.pop %v466
    %v468 = vmul.f32 1.0, %v467
    %v469 = vmul.f32 %v460, %v468
    %v470 = vld [vmem:[#allocation7] sm:$0xff]
    %v471 = vld [vmem:[#allocation7 + $0x8] sm:$0xff]
    %v472 = vld [vmem:[#allocation7 + $0x10] sm:$0xff]
    %v473 = vld [vmem:[#allocation7 + $0x18] sm:$0xff]
    %v474 = vld [vmem:[#allocation7 + $0x20] sm:$0xff]
    %v475 = vld [vmem:[#allocation7 + $0x28] sm:$0xff]
    %v476 = vld [vmem:[#allocation7 + $0x30] sm:$0xff]
    %v477 = vld [vmem:[#allocation7 + $0x38] sm:$0xff]
    %v478 = vld [vmem:[#allocation7 + $0x40] sm:$0xff]
    %v479 = vld [vmem:[#allocation7 + $0x48] sm:$0xff]
    %v480 = vld [vmem:[#allocation7 + $0x50] sm:$0xff]
    %v481 = vld [vmem:[#allocation7 + $0x58] sm:$0xff]
    %v482 = vld [vmem:[#allocation7 + $0x60] sm:$0xff]
    %v483 = vld [vmem:[#allocation7 + $0x68] sm:$0xff]
    %v484 = vld [vmem:[#allocation7 + $0x70] sm:$0xff]
    %v485 = vld [vmem:[#allocation7 + $0x78] sm:$0xff]
    %v486 = vld [vmem:[%s8] sm:$0x1]
    %v488 = vlaneseq
    %v489 = vshrl.u32 %v488, 7
    %v490 = vsub.s32 0, %v489
    %v491 = vrot.slane %v486, %v490
    %493 = vmatprep.subr.mxu0 0.0
    %494 = vmatpush1.msra.mxu0 %v470
    %495 = vmatprep.subr.mxu0 0.0
    %496 = vmatpush1.msra.mxu0 %v471
    %497 = vmatprep.subr.mxu0 0.0
    %498 = vmatpush1.msra.mxu0 %v472
    %499 = vmatprep.subr.mxu0 0.0
    %500 = vmatpush1.msra.mxu0 %v473
    %501 = vmatprep.subr.mxu0 0.0
    %502 = vmatpush1.msra.mxu0 %v474
    %503 = vmatprep.subr.mxu0 0.0
    %504 = vmatpush1.msra.mxu0 %v475
    %505 = vmatprep.subr.mxu0 0.0
    %506 = vmatpush1.msra.mxu0 %v476
    %507 = vmatprep.subr.mxu0 0.0
    %508 = vmatpush1.msra.mxu0 %v477
    %509 = vmatprep.subr.mxu0 0.0
    %510 = vmatpush1.msra.mxu0 %v478
    %511 = vmatprep.subr.mxu0 0.0
    %512 = vmatpush1.msra.mxu0 %v479
    %513 = vmatprep.subr.mxu0 0.0
    %514 = vmatpush1.msra.mxu0 %v480
    %515 = vmatprep.subr.mxu0 0.0
    %516 = vmatpush1.msra.mxu0 %v481
    %517 = vmatprep.subr.mxu0 0.0
    %518 = vmatpush1.msra.mxu0 %v482
    %519 = vmatprep.subr.mxu0 0.0
    %520 = vmatpush1.msra.mxu0 %v483
    %521 = vmatprep.subr.mxu0 0.0
    %522 = vmatpush1.msra.mxu0 %v484
    %523 = vmatprep.subr.mxu0 0.0
    %524 = vmatpush1.msra.mxu0 %v485
    %525 = vmatprep.subr.mxu0 0.0
    %526 = vmatpush1.msra.mxu0 0.0
    %527 = vmatprep.subr.mxu0 0.0
    %528 = vmatpush1.msra.mxu0 0.0
    %529 = vmatprep.subr.mxu0 0.0
    %530 = vmatpush1.msra.mxu0 0.0
    %531 = vmatprep.subr.mxu0 0.0
    %532 = vmatpush1.msra.mxu0 0.0
    %533 = vmatprep.subr.mxu0 0.0
    %534 = vmatpush1.msra.mxu0 0.0
    %535 = vmatprep.subr.mxu0 0.0
    %536 = vmatpush1.msra.mxu0 0.0
    %537 = vmatprep.subr.mxu0 0.0
    %538 = vmatpush1.msra.mxu0 0.0
    %539 = vmatprep.subr.mxu0 0.0
    %540 = vmatpush1.msra.mxu0 0.0
    %541 = vmatprep.subr.mxu0 0.0
    %542 = vmatpush1.msra.mxu0 0.0
    %543 = vmatprep.subr.mxu0 0.0
    %544 = vmatpush1.msra.mxu0 0.0
    %545 = vmatprep.subr.mxu0 0.0
    %546 = vmatpush1.msra.mxu0 0.0
    %547 = vmatprep.subr.mxu0 0.0
    %548 = vmatpush1.msra.mxu0 0.0
    %549 = vmatprep.subr.mxu0 0.0
    %550 = vmatpush1.msra.mxu0 0.0
    %551 = vmatprep.subr.mxu0 0.0
    %552 = vmatpush1.msra.mxu0 0.0
    %553 = vmatprep.subr.mxu0 0.0
    %554 = vmatpush1.msra.mxu0 0.0
    %555 = vmatprep.subr.mxu0 0.0
    %556 = vmatpush1.msra.mxu0 0.0
    %557 = vmatprep.mubr.f32.mxu0 0.0
    %558 = vmatmul.mubr.f32.gmra.mrb[0].mxu0 %v469
    %v559 = vpop.f32.mrb[0].mxu0
    %v560 = vadd.f32 %v491, %v559
    %v561 = vpop.f32.mrb[0].mxu0
    %562 = vdwg.mxu0
    %563 = vst [vmem:[#allocation8] sm:$0xff] %v560
    // Predicated region
    $region50: #{tpu_custom_call.1} parent=1 // pred_check
      _
    $region51: #{tpu_custom_call.1} parent=1 // pred_check_branch
      %565 = sbr.rel (0) target = $region53
    $region52: #{tpu_custom_call.1} parent=1 // pred_region
      %s567 = ssub.s32 128, 128
      %568 = vsyncadd [#allocation4], %s567
      %s570 = sshll.u32 [#allocation8], 4
      %s571 = int_to_ptr.vmem [resolvable:$true] %s570
      %573 = dma.vmem_to_hbm [thread:$0]  %s571, 128, %s9, [#allocation4]
    $region53: #{tpu_custom_call.1} parent=1 // pred_fallthru
      _
    // Predicated region
    $region54: #{tpu_custom_call.1} parent=1 // pred_check
      _
    $region55: #{tpu_custom_call.1} parent=1 // pred_check_branch
      %575 = sbr.rel (0) target = $region57
    $region56: #{tpu_custom_call.1} parent=1 // pred_region
      %576 = dma.done [#allocation4], 128
    $region57: #{tpu_custom_call.1} parent=1 // pred_fallthru
      _
    %577 = vsyncpa [#allocation3], 1
    %578 = vsyncpa [#allocation6], 1
    %579 = vsyncpa [#allocation4], 1

</llo_original>
